<compile_context>
chip_gen: v7x
topology: tpu7x:2x2x1
jax: 0.10.0
libtpu: 0.0.40
codegen_flags: <defaults>
</compile_context>

<pallas_src>
import jax
import jax.numpy as jnp
from jax.experimental import pallas as pl
from jax.experimental.pallas import tpu as pltpu

LN_EPS = 1e-5


def _round_up(x, m):
    return (x + m - 1) // m * m


def _vmem_capacity_bytes():
    """Physical per-core VMEM; conservative (v7x) fallback if query fails."""
    try:
        return int(pltpu.get_tpu_info().vmem_capacity_bytes)
    except Exception:
        return 64 * 1024 * 1024


def _layer_norm_f32(r, g, beta):
    """Single-pass LayerNorm stats: var = E[r^2] - mean^2 (halves XLU work)."""
    mean = jnp.mean(r, axis=-1, keepdims=True)
    msq = jnp.mean(r * r, axis=-1, keepdims=True)
    var = msq - mean * mean
    return (r - mean) * jax.lax.rsqrt(var + LN_EPS) * g + beta


def ffn_resident_kernel(x_ref, w1_ref, b1_ref, w2_ref, b2_ref, g_ref, beta_ref,
                        o_ref):
    """Path A: both (H, H) weights resident in VMEM; one (tm, H) row tile."""
    x = x_ref[...]
    xm = x.astype(w1_ref.dtype)

    # fc1: x @ W1t + b1, ReLU.  W1t is (in, out): contraction axis is sublane.
    h = jnp.dot(xm, w1_ref[...], preferred_element_type=jnp.float32)
    h = jnp.maximum(h + b1_ref[...], 0.0)

    # fc2: relu(h) @ W2t + b2 (f32 accumulation, operands in gemm dtype).
    y = jnp.dot(h.astype(w2_ref.dtype), w2_ref[...],
                preferred_element_type=jnp.float32)

    # Residual + LayerNorm, all f32.
    r = x.astype(jnp.float32) + y + b2_ref[...]
    o_ref[...] = _layer_norm_f32(r, g_ref[...], beta_ref[...]).astype(o_ref.dtype)


def ffn_ktiled_kernel(x_ref, w1_ref, b1_ref, w2_ref, b2_ref, g_ref, beta_ref,
                      o_ref, acc_ref):
    """Path B: intermediate dim tiled (tk); W1t (H,tk) / W2t (tk,H) streamed."""
    k = pl.program_id(1)

    @pl.when(k == 0)
    def _():
        acc_ref[...] = jnp.zeros_like(acc_ref)

    xm = x_ref[...].astype(w1_ref.dtype)
    h = jnp.dot(xm, w1_ref[...], preferred_element_type=jnp.float32)   # (tm, tk)
    h = jnp.maximum(h + b1_ref[...], 0.0)
    acc_ref[...] += jnp.dot(h.astype(w2_ref.dtype), w2_ref[...],
                            preferred_element_type=jnp.float32)        # (tm, H)

    @pl.when(k == pl.num_programs(1) - 1)
    def _():
        r = x_ref[...].astype(jnp.float32) + acc_ref[...] + b2_ref[...]
        o_ref[...] = _layer_norm_f32(r, g_ref[...], beta_ref[...]).astype(o_ref.dtype)


def ffn_pallas(x, w1, b1, w2, b2, gamma, beta, *, tm_max=None,
               use_bf16_gemm=False):
    """x: (B, S, H). w1/w2 torch-shaped (out, in) = (H, H). Returns (B, S, H)."""
    B, S, H = x.shape
    rows = B * S
    orig_dtype = x.dtype

    # GEMM operand dtype (optionally bf16 for f32 deployments, esp. v5e).
    gemm_dtype = (jnp.bfloat16 if (use_bf16_gemm and x.dtype == jnp.float32)
                  else x.dtype)

    # Row tile: big for small-H (HBM-bound) shapes, smaller when H is huge,
    # always a multiple of 8 and split into >=2 tiles for megacore sharding.
    if tm_max is None:
        if H <= 512:
            tm_max = 512
        elif H >= 4096:
            tm_max = 128
        else:
            tm_max = 256
    tm = min(tm_max, _round_up(rows, 8))
    while tm > 8 and pl.cdiv(rows, tm) < 2:
        tm = max(8, _round_up(tm // 2, 8))
    rows_p = _round_up(rows, tm)
    n_row_tiles = rows_p // tm

    x2 = x.reshape(rows, H)
    if rows_p != rows:
        x2 = jnp.pad(x2, ((0, rows_p - rows), (0, 0)))

    # One-time HBM-side transpose to (in, out): the kernel contracts the RHS
    # sublane axis (native MXU weight-push orientation) -> no in-body relayout.
    w1t = w1.T.astype(gemm_dtype)
    w2t = w2.T.astype(gemm_dtype)
    b1_2 = b1.reshape(1, H).astype(jnp.float32)
    b2_2 = b2.reshape(1, H).astype(jnp.float32)
    g_2 = gamma.reshape(1, H).astype(jnp.float32)
    beta_2 = beta.reshape(1, H).astype(jnp.float32)

    bpe_w = jnp.dtype(gemm_dtype).itemsize
    bpe_x = jnp.dtype(orig_dtype).itemsize
    cap = _vmem_capacity_bytes()
    vmem_cap = int(0.85 * cap)

    vmem_param = pl.BlockSpec(memory_space=pltpu.MemorySpace.VMEM)

    cost = pl.CostEstimate(
        flops=4 * rows_p * H * H,                                   # two HxH GEMMs
        transcendentals=rows_p,                                     # rsqrt per row
        bytes_accessed=2 * rows_p * H * bpe_x + 2 * H * H * bpe_w + 4 * H * 4,
    )

    # VMEM needed for the fully-resident-weights path.
    resident_need = (2 * H * H * bpe_w           # W1t, W2t (single buffer)
                     + 4 * H * 4                 # b1, b2, gamma, beta (f32)
                     + 2 * 2 * tm * H * bpe_x    # x / out tiles, double-buffered
                     + 3 * tm * H * 4)           # live f32 intermediates

    if resident_need <= int(0.6 * cap):
        # ---------- Path A: resident weights, 1-D parallel row grid ----------
        vmem_limit = int(min(max(int(1.5 * resident_need), 32 * 1024 * 1024),
                             vmem_cap))
        out = pl.pallas_call(
            ffn_resident_kernel,
            out_shape=jax.ShapeDtypeStruct((rows_p, H), orig_dtype),
            grid_spec=pltpu.PrefetchScalarGridSpec(
                num_scalar_prefetch=0,
                grid=(n_row_tiles,),
                in_specs=[
                    pl.BlockSpec((tm, H), lambda i: (i, 0)),   # x row tile
                    vmem_param,                                # W1t (in, out)
                    vmem_param,                                # b1
                    vmem_param,                                # W2t (in, out)
                    vmem_param,                                # b2
                    vmem_param,                                # gamma
                    vmem_param,                                # beta
                ],
                out_specs=pl.BlockSpec((tm, H), lambda i: (i, 0)),
            ),
            compiler_params=pltpu.CompilerParams(
                dimension_semantics=("parallel",),
                vmem_limit_bytes=vmem_limit,
            ),
            cost_estimate=cost,
        )(x2, w1t, b1_2, w2t, b2_2, g_2, beta_2)
    else:
        # ---------- Path B: stream weight tiles over the intermediate dim ----
        if H % 512 == 0:
            tk = 512
        elif H % 256 == 0:
            tk = 256
        elif H % 128 == 0:
            tk = 128
        else:
            tk = H   # degenerate single k-step (still pipelined, not resident)
        n_k = H // tk
        tiled_need = (2 * 2 * H * tk * bpe_w      # W1t/W2t tiles, double-buffered
                      + 2 * 2 * tm * H * bpe_x    # x / out tiles, double-buffered
                      + tm * H * 4                # f32 accumulator scratch
                      + 2 * tm * tk * 4           # fc1 partials
                      + 3 * H * 4 + 2 * tk * 4)   # LN params / bias tiles
        vmem_limit = int(min(max(int(1.5 * tiled_need), 32 * 1024 * 1024),
                             vmem_cap))
        out = pl.pallas_call(
            ffn_ktiled_kernel,
            out_shape=jax.ShapeDtypeStruct((rows_p, H), orig_dtype),
            grid_spec=pltpu.PrefetchScalarGridSpec(
                num_scalar_prefetch=0,
                grid=(n_row_tiles, n_k),
                in_specs=[
                    pl.BlockSpec((tm, H), lambda i, k: (i, 0)),   # x row tile
                    pl.BlockSpec((H, tk), lambda i, k: (0, k)),   # W1t tile
                    pl.BlockSpec((1, tk), lambda i, k: (0, k)),   # b1 tile
                    pl.BlockSpec((tk, H), lambda i, k: (k, 0)),   # W2t tile
                    vmem_param,                                   # b2
                    vmem_param,                                   # gamma
                    vmem_param,                                   # beta
                ],
                out_specs=pl.BlockSpec((tm, H), lambda i, k: (i, 0)),
                scratch_shapes=[pltpu.VMEM((tm, H), jnp.float32)],
            ),
            compiler_params=pltpu.CompilerParams(
                dimension_semantics=("parallel", "arbitrary"),
                vmem_limit_bytes=vmem_limit,
            ),
            cost_estimate=cost,
        )(x2, w1t, b1_2, w2t, b2_2, g_2, beta_2)

    return out[:rows].reshape(B, S, H)


def reference_ffn(x, w1, b1, w2, b2, gamma, beta):
    """Pure-JAX reference matching the PyTorch forward exactly."""
    h = jnp.maximum(x @ w1.T + b1, 0.0)
    y = h @ w2.T + b2
    r = x + y
    mean = jnp.mean(r, axis=-1, keepdims=True)
    var = jnp.mean((r - mean) ** 2, axis=-1, keepdims=True)
    return (r - mean) / jnp.sqrt(var + LN_EPS) * gamma + beta


if __name__ == "__main__":
    B, S, H = 2, 8, 32  # batch, seq, hidden (small demo shape)
    # NOTE: in real deployments H should be a multiple of 128 for lane-dense
    # stores; at H=32 the demo intentionally stays tiny.

    key = jax.random.PRNGKey(0)
    kx, k1, k2, k3, k4 = jax.random.split(key, 5)

    x = jax.random.normal(kx, (B, S, H), dtype=jnp.float32)

    # Deterministic parameter init (torch Linear shapes: weight (out, in)).
    bound = 1.0 / (H ** 0.5)
    w1 = jax.random.uniform(k1, (H, H), minval=-bound, maxval=bound, dtype=jnp.float32)
    b1 = jax.random.uniform(k2, (H,), minval=-bound, maxval=bound, dtype=jnp.float32)
    w2 = jax.random.uniform(k3, (H, H), minval=-bound, maxval=bound, dtype=jnp.float32)
    b2 = jax.random.uniform(k4, (H,), minval=-bound, maxval=bound, dtype=jnp.float32)
    gamma = jnp.ones((H,), dtype=jnp.float32)   # nn.LayerNorm default init
    beta = jnp.zeros((H,), dtype=jnp.float32)

    out = jax.block_until_ready(ffn_pallas(x, w1, b1, w2, b2, gamma, beta))

    ref = reference_ffn(x, w1, b1, w2, b2, gamma, beta)
    assert out.shape == (B, S, H)
    assert jnp.allclose(out, ref, atol=1e-5, rtol=1e-5), "mismatch vs reference"

    print("KERNEL_OK")
</pallas_src>

<mosaic_0001>
module attributes {stable_mosaic.version = 11 : i64} {
  func.func @ffn_resident_kernel(%arg0: i32, %arg1: memref<8x32xf32, #tpu.memory_space<vmem>>, %arg2: memref<32x32xf32, #tpu.memory_space<vmem>>, %arg3: memref<1x32xf32, #tpu.memory_space<vmem>>, %arg4: memref<32x32xf32, #tpu.memory_space<vmem>>, %arg5: memref<1x32xf32, #tpu.memory_space<vmem>>, %arg6: memref<1x32xf32, #tpu.memory_space<vmem>>, %arg7: memref<1x32xf32, #tpu.memory_space<vmem>>, %arg8: memref<8x32xf32, #tpu.memory_space<vmem>>) attributes {dimension_semantics = [#tpu.dimension_semantics<parallel>], iteration_bounds = array<i64: 2>, scalar_prefetch = 0 : i64, scratch_operands = 0 : i64, tpu.core_type = #tpu.core_type<tc>, window_params = [{transform_indices = @transform_0, window_bounds = array<i64: 8, 32>}, {pipeline_mode = #tpu.pipeline_mode<synchronous>, transform_indices = @transform_1, window_bounds = array<i64: 32, 32>}, {pipeline_mode = #tpu.pipeline_mode<synchronous>, transform_indices = @transform_2, window_bounds = array<i64: 1, 32>}, {pipeline_mode = #tpu.pipeline_mode<synchronous>, transform_indices = @transform_3, window_bounds = array<i64: 32, 32>}, {pipeline_mode = #tpu.pipeline_mode<synchronous>, transform_indices = @transform_4, window_bounds = array<i64: 1, 32>}, {pipeline_mode = #tpu.pipeline_mode<synchronous>, transform_indices = @transform_5, window_bounds = array<i64: 1, 32>}, {pipeline_mode = #tpu.pipeline_mode<synchronous>, transform_indices = @transform_6, window_bounds = array<i64: 1, 32>}, {transform_indices = @transform_7, window_bounds = array<i64: 8, 32>}]} {
    %c0 = arith.constant 0 : index
    %c0_0 = arith.constant 0 : index
    %0 = vector.load %arg1[%c0, %c0_0] : memref<8x32xf32, #tpu.memory_space<vmem>>, vector<8x32xf32>
    %c0_1 = arith.constant 0 : index
    %c0_2 = arith.constant 0 : index
    %1 = vector.load %arg2[%c0_1, %c0_2] : memref<32x32xf32, #tpu.memory_space<vmem>>, vector<32x32xf32>
    %cst = arith.constant dense<0.000000e+00> : vector<8x32xf32>
    %2 = tpu.matmul %0, %1, %cst {dimension_numbers = #tpu.dot_dimension_numbers<[1], [0], [0], [1], [0, 0, 1, 1], [], []>} : vector<8x32xf32>, vector<32x32xf32>, vector<8x32xf32> -> vector<8x32xf32>
    %c0_3 = arith.constant 0 : index
    %c0_4 = arith.constant 0 : index
    %3 = vector.load %arg3[%c0_3, %c0_4] : memref<1x32xf32, #tpu.memory_space<vmem>>, vector<1x32xf32>
    %4 = vector.broadcast %3 : vector<1x32xf32> to vector<8x32xf32>
    %5 = arith.addf %2, %4 : vector<8x32xf32>
    %cst_5 = arith.constant 0.000000e+00 : f32
    %6 = vector.broadcast %cst_5 : f32 to vector<8x32xf32>
    %7 = arith.maximumf %5, %6 : vector<8x32xf32>
    %c0_6 = arith.constant 0 : index
    %c0_7 = arith.constant 0 : index
    %8 = vector.load %arg4[%c0_6, %c0_7] : memref<32x32xf32, #tpu.memory_space<vmem>>, vector<32x32xf32>
    %cst_8 = arith.constant dense<0.000000e+00> : vector<8x32xf32>
    %9 = tpu.matmul %7, %8, %cst_8 {dimension_numbers = #tpu.dot_dimension_numbers<[1], [0], [0], [1], [0, 0, 1, 1], [], []>} : vector<8x32xf32>, vector<32x32xf32>, vector<8x32xf32> -> vector<8x32xf32>
    %10 = arith.addf %0, %9 : vector<8x32xf32>
    %c0_9 = arith.constant 0 : index
    %c0_10 = arith.constant 0 : index
    %11 = vector.load %arg5[%c0_9, %c0_10] : memref<1x32xf32, #tpu.memory_space<vmem>>, vector<1x32xf32>
    %12 = vector.broadcast %11 : vector<1x32xf32> to vector<8x32xf32>
    %13 = arith.addf %10, %12 : vector<8x32xf32>
    %c0_11 = arith.constant 0 : index
    %c0_12 = arith.constant 0 : index
    %14 = vector.load %arg6[%c0_11, %c0_12] : memref<1x32xf32, #tpu.memory_space<vmem>>, vector<1x32xf32>
    %c0_13 = arith.constant 0 : index
    %c0_14 = arith.constant 0 : index
    %15 = vector.load %arg7[%c0_13, %c0_14] : memref<1x32xf32, #tpu.memory_space<vmem>>, vector<1x32xf32>
    %cst_15 = arith.constant dense<0.000000e+00> : vector<8xf32>
    %16 = vector.multi_reduction <add>, %13, %cst_15 [1] : vector<8x32xf32> to vector<8xf32>
    %17 = vector.shape_cast %16 : vector<8xf32> to vector<8x1xf32>
    %cst_16 = arith.constant 3.200000e+01 : f32
    %18 = vector.broadcast %cst_16 : f32 to vector<8x1xf32>
    %19 = arith.divf %17, %18 : vector<8x1xf32>
    %20 = arith.mulf %13, %13 : vector<8x32xf32>
    %cst_17 = arith.constant dense<0.000000e+00> : vector<8xf32>
    %21 = vector.multi_reduction <add>, %20, %cst_17 [1] : vector<8x32xf32> to vector<8xf32>
    %22 = vector.shape_cast %21 : vector<8xf32> to vector<8x1xf32>
    %cst_18 = arith.constant 3.200000e+01 : f32
    %23 = vector.broadcast %cst_18 : f32 to vector<8x1xf32>
    %24 = arith.divf %22, %23 : vector<8x1xf32>
    %25 = arith.mulf %19, %19 : vector<8x1xf32>
    %26 = arith.subf %24, %25 : vector<8x1xf32>
    %27 = vector.broadcast %19 : vector<8x1xf32> to vector<8x32xf32>
    %28 = arith.subf %13, %27 : vector<8x32xf32>
    %cst_19 = arith.constant 9.99999974E-6 : f32
    %29 = vector.broadcast %cst_19 : f32 to vector<8x1xf32>
    %30 = arith.addf %26, %29 : vector<8x1xf32>
    %31 = math.rsqrt %30 : vector<8x1xf32>
    %32 = vector.broadcast %31 : vector<8x1xf32> to vector<8x32xf32>
    %33 = arith.mulf %28, %32 : vector<8x32xf32>
    %34 = vector.broadcast %14 : vector<1x32xf32> to vector<8x32xf32>
    %35 = arith.mulf %33, %34 : vector<8x32xf32>
    %36 = vector.broadcast %15 : vector<1x32xf32> to vector<8x32xf32>
    %37 = arith.addf %35, %36 : vector<8x32xf32>
    %c0_20 = arith.constant 0 : index
    %c0_21 = arith.constant 0 : index
    %38 = vector.load %arg8[%c0_20, %c0_21] : memref<8x32xf32, #tpu.memory_space<vmem>>, vector<8x32xf32>
    tpu.vector_store %arg8[%c0_20, %c0_21], %37 {strides = array<i32>} : memref<8x32xf32, #tpu.memory_space<vmem>>, vector<8x32xf32>,
    return
  }
  func.func @transform_0(%arg0: i32) -> (i32, i32) {
    %c0_i32 = arith.constant 0 : i32
    %c0_i32_0 = arith.constant 0 : i32
    return %arg0, %c0_i32 : i32, i32
  }
  func.func @transform_1(%arg0: i32) -> (i32, i32) {
    %c0_i32 = arith.constant 0 : i32
    %c0_i32_0 = arith.constant 0 : i32
    %c0_i32_1 = arith.constant 0 : i32
    return %c0_i32, %c0_i32_0 : i32, i32
  }
  func.func @transform_2(%arg0: i32) -> (i32, i32) {
    %c0_i32 = arith.constant 0 : i32
    %c0_i32_0 = arith.constant 0 : i32
    %c0_i32_1 = arith.constant 0 : i32
    return %c0_i32, %c0_i32_0 : i32, i32
  }
  func.func @transform_3(%arg0: i32) -> (i32, i32) {
    %c0_i32 = arith.constant 0 : i32
    %c0_i32_0 = arith.constant 0 : i32
    %c0_i32_1 = arith.constant 0 : i32
    return %c0_i32, %c0_i32_0 : i32, i32
  }
  func.func @transform_4(%arg0: i32) -> (i32, i32) {
    %c0_i32 = arith.constant 0 : i32
    %c0_i32_0 = arith.constant 0 : i32
    %c0_i32_1 = arith.constant 0 : i32
    return %c0_i32, %c0_i32_0 : i32, i32
  }
  func.func @transform_5(%arg0: i32) -> (i32, i32) {
    %c0_i32 = arith.constant 0 : i32
    %c0_i32_0 = arith.constant 0 : i32
    %c0_i32_1 = arith.constant 0 : i32
    return %c0_i32, %c0_i32_0 : i32, i32
  }
  func.func @transform_6(%arg0: i32) -> (i32, i32) {
    %c0_i32 = arith.constant 0 : i32
    %c0_i32_0 = arith.constant 0 : i32
    %c0_i32_1 = arith.constant 0 : i32
    return %c0_i32, %c0_i32_0 : i32, i32
  }
  func.func @transform_7(%arg0: i32) -> (i32, i32) {
    %c0_i32 = arith.constant 0 : i32
    %c0_i32_0 = arith.constant 0 : i32
    return %arg0, %c0_i32 : i32, i32
  }
}

</mosaic_0001>

<llo_original>
// kernel: tpu_custom_call.1
$region0: #{tpu_custom_call.1}
  #allocation0 [shape = 'u32[]', space=smem, size = 0x4, offset = 0x4, fixed_abs, tag = 'smem constant byte address 0x4 - core index']
  #allocation1 [shape = 'u32[144,128]{1,0:T(1,128)}', space=vmem, size = 0x12000, scoped, tag = 'internal scratch']
  %s0 = inlined_call_operand.hbm [shape: f32[16,32], index: 0, kind: input, shape index: {}]
  %s1 = inlined_call_operand.hbm [shape: f32[32,32], index: 1, kind: input, shape index: {}]
  %s2 = inlined_call_operand.vmem [shape: f32[1,32], index: 2, kind: input, shape index: {}]
  %s3 = inlined_call_operand.hbm [shape: f32[32,32], index: 3, kind: input, shape index: {}]
  %s4 = inlined_call_operand.vmem [shape: f32[1,32], index: 4, kind: input, shape index: {}]
  %s5 = inlined_call_operand.vmem [shape: f32[1,32], index: 5, kind: input, shape index: {}]
  %s6 = inlined_call_operand.vmem [shape: f32[1,32], index: 6, kind: input, shape index: {}]
  %s7 = inlined_call_operand.hbm [shape: f32[16,32], index: 7, kind: output, shape index: {}]
  %s8 = sld [smem:[#allocation0]]
  $region73: #{tpu_custom_call.1} parent=0
    _
  %s10 = ssub.s32 1, %s8
  %s11 = scalar_select 0, %s10, %s8
  $region1: #{tpu_custom_call.1} parent=0
    #allocation2 [shape = 'u8[8192]{0}', space=vmem, size = 0x2000, scoped, tag = 'input window, operand 0']
    #allocation3 [shape = 's32[2]{0}', space=sflag, size = 0x8, scoped, tag = 'scoped memory for tpu_custom_call.1']
    #allocation4 [shape = 's32[2]{0}', space=sflag, size = 0x8, scoped, tag = 'scoped memory for tpu_custom_call.1']
    #allocation5 [shape = 'u8[16384]{0}', space=vmem, size = 0x4000, scoped, tag = 'input window, operand 1, single buffered']
    #allocation6 [shape = 's32[1]{0}', space=sflag, size = 0x4, scoped, tag = 'scoped memory for tpu_custom_call.1']
    #allocation7 [shape = 'u8[16384]{0}', space=vmem, size = 0x4000, scoped, tag = 'input window, operand 3, single buffered']
    #allocation8 [shape = 'u8[8192]{0}', space=vmem, size = 0x2000, scoped, tag = 'output window, operand 0']
    %12 = vsyncpa [#allocation3], 0
    %s13 = scalar_lea.sflag [#allocation3], 1
    %14 = vsyncpa %s13, 0
    %15 = vsyncpa [#allocation6], 0
    %16 = vsyncpa [#allocation4], 0
    %s17 = scalar_lea.sflag [#allocation4], 1
    %18 = vsyncpa %s17, 0
    loop: start=0, step=1, limit=4
    $region2: #{tpu_custom_call.1} parent=1 // loop_pre_header
      _
    $region3: #{tpu_custom_call.1} parent=1 // loop_header
      %s20 = sphi 0, %s24
      %p21 = scmp.ge.s32.totalorder %s20, 4
      %s30 = sphi 0, %s32
      %s33 = sphi 0, %s30
      %s34 = sphi 0, %s33
      %s50 = sphi 0, %s34
      %s54 = sphi 0, %s54
      %s56 = sphi 0, %s54
      %s57 = sphi 0, %s56
      %s71 = sphi 0, %s57
      %s75 = sphi 0, %s75
      %s77 = sphi 0, %s75
      %s78 = sphi 0, %s77
      %s92 = sphi 0, %s78
      %s96 = sphi 0, %s96
      %s98 = sphi 0, %s96
      %s99 = sphi 0, %s98
      %s113 = sphi 0, %s99
      %s117 = sphi 0, %s117
      %s119 = sphi 0, %s117
      %s120 = sphi 0, %s119
      %s134 = sphi 0, %s120
      %s138 = sphi 0, %s138
      %s140 = sphi 0, %s138
      %s141 = sphi 0, %s140
      %s155 = sphi 0, %s141
      %s159 = sphi 0, %s159
      %s161 = sphi 0, %s159
      %s162 = sphi 0, %s161
      %s176 = sphi 0, %s162
      %s182 = sphi 0, %s184
      %s185 = sphi 0, %s182
      %s186 = sphi 0, %s185
      %s202 = sphi 0, %s186
    $region4: #{tpu_custom_call.1} parent=1 // loop_header_branch
      %23 = sbr.rel (%p21) target = $region8
    $region5: #{tpu_custom_call.1} parent=1 // loop_body
      %s25 = ssub.s32 %s20, 1
      %s26 = ssub.s32 %s20, 2
      %s27 = sadd.s32 %s20, 1
      %s28 = ssub.s32 %s20, %s27
      %p29 = scmp.eq.s32.totalorder %s28, 0
      %s31 = sadd.s32 %s30, 1
      %s32 = scalar_select %p29, %s30, %s31
      %p35 = pneg %p29
      %p36 = scmp.eq.s32.totalorder %s20, 1
      %p37 = por %p35, %p36
      %p38 = scmp.ne.s32.totalorder %s30, %s33
      %p39 = scmp.eq.s32.totalorder %s20, 0
      %p40 = por %p38, %p39
      %p41 = scmp.ne.s32.totalorder %s30, %s33
      %p42 = scmp.eq.s32.totalorder %s25, 1
      %p43 = por %p41, %p42
      %p44 = scmp.ne.s32.totalorder %s33, %s34
      %p45 = scmp.eq.s32.totalorder %s25, 0
      %p46 = por %p44, %p45
      %p47 = scmp.ne.s32.totalorder %s33, %s34
      %p48 = scmp.eq.s32.totalorder %s26, 1
      %p49 = por %p47, %p48
      %p51 = scmp.ne.s32.totalorder %s34, %s50
      %p52 = scmp.eq.s32.totalorder %s26, 0
      %p53 = por %p51, %p52
      %s55 = sadd.s32 %s54, 1
      %p58 = scmp.eq.s32.totalorder %s20, 1
      %p59 = scmp.ne.s32.totalorder %s54, %s56
      %p60 = scmp.eq.s32.totalorder %s20, 0
      %p61 = por %p59, %p60
      %p62 = scmp.ne.s32.totalorder %s54, %s56
      %p63 = scmp.eq.s32.totalorder %s25, 1
      %p64 = por %p62, %p63
      %p65 = scmp.ne.s32.totalorder %s56, %s57
      %p66 = scmp.eq.s32.totalorder %s25, 0
      %p67 = por %p65, %p66
      %p68 = scmp.ne.s32.totalorder %s56, %s57
      %p69 = scmp.eq.s32.totalorder %s26, 1
      %p70 = por %p68, %p69
      %p72 = scmp.ne.s32.totalorder %s57, %s71
      %p73 = scmp.eq.s32.totalorder %s26, 0
      %p74 = por %p72, %p73
      %s76 = sadd.s32 %s75, 1
      %p79 = scmp.eq.s32.totalorder %s20, 1
      %p80 = scmp.ne.s32.totalorder %s75, %s77
      %p81 = scmp.eq.s32.totalorder %s20, 0
      %p82 = por %p80, %p81
      %p83 = scmp.ne.s32.totalorder %s75, %s77
      %p84 = scmp.eq.s32.totalorder %s25, 1
      %p85 = por %p83, %p84
      %p86 = scmp.ne.s32.totalorder %s77, %s78
      %p87 = scmp.eq.s32.totalorder %s25, 0
      %p88 = por %p86, %p87
      %p89 = scmp.ne.s32.totalorder %s77, %s78
      %p90 = scmp.eq.s32.totalorder %s26, 1
      %p91 = por %p89, %p90
      %p93 = scmp.ne.s32.totalorder %s78, %s92
      %p94 = scmp.eq.s32.totalorder %s26, 0
      %p95 = por %p93, %p94
      %s97 = sadd.s32 %s96, 1
      %p100 = scmp.eq.s32.totalorder %s20, 1
      %p101 = scmp.ne.s32.totalorder %s96, %s98
      %p102 = scmp.eq.s32.totalorder %s20, 0
      %p103 = por %p101, %p102
      %p104 = scmp.ne.s32.totalorder %s96, %s98
      %p105 = scmp.eq.s32.totalorder %s25, 1
      %p106 = por %p104, %p105
      %p107 = scmp.ne.s32.totalorder %s98, %s99
      %p108 = scmp.eq.s32.totalorder %s25, 0
      %p109 = por %p107, %p108
      %p110 = scmp.ne.s32.totalorder %s98, %s99
      %p111 = scmp.eq.s32.totalorder %s26, 1
      %p112 = por %p110, %p111
      %p114 = scmp.ne.s32.totalorder %s99, %s113
      %p115 = scmp.eq.s32.totalorder %s26, 0
      %p116 = por %p114, %p115
      %s118 = sadd.s32 %s117, 1
      %p121 = scmp.eq.s32.totalorder %s20, 1
      %p122 = scmp.ne.s32.totalorder %s117, %s119
      %p123 = scmp.eq.s32.totalorder %s20, 0
      %p124 = por %p122, %p123
      %p125 = scmp.ne.s32.totalorder %s117, %s119
      %p126 = scmp.eq.s32.totalorder %s25, 1
      %p127 = por %p125, %p126
      %p128 = scmp.ne.s32.totalorder %s119, %s120
      %p129 = scmp.eq.s32.totalorder %s25, 0
      %p130 = por %p128, %p129
      %p131 = scmp.ne.s32.totalorder %s119, %s120
      %p132 = scmp.eq.s32.totalorder %s26, 1
      %p133 = por %p131, %p132
      %p135 = scmp.ne.s32.totalorder %s120, %s134
      %p136 = scmp.eq.s32.totalorder %s26, 0
      %p137 = por %p135, %p136
      %s139 = sadd.s32 %s138, 1
      %p142 = scmp.eq.s32.totalorder %s20, 1
      %p143 = scmp.ne.s32.totalorder %s138, %s140
      %p144 = scmp.eq.s32.totalorder %s20, 0
      %p145 = por %p143, %p144
      %p146 = scmp.ne.s32.totalorder %s138, %s140
      %p147 = scmp.eq.s32.totalorder %s25, 1
      %p148 = por %p146, %p147
      %p149 = scmp.ne.s32.totalorder %s140, %s141
      %p150 = scmp.eq.s32.totalorder %s25, 0
      %p151 = por %p149, %p150
      %p152 = scmp.ne.s32.totalorder %s140, %s141
      %p153 = scmp.eq.s32.totalorder %s26, 1
      %p154 = por %p152, %p153
      %p156 = scmp.ne.s32.totalorder %s141, %s155
      %p157 = scmp.eq.s32.totalorder %s26, 0
      %p158 = por %p156, %p157
      %s160 = sadd.s32 %s159, 1
      %p163 = scmp.eq.s32.totalorder %s20, 1
      %p164 = scmp.ne.s32.totalorder %s159, %s161
      %p165 = scmp.eq.s32.totalorder %s20, 0
      %p166 = por %p164, %p165
      %p167 = scmp.ne.s32.totalorder %s159, %s161
      %p168 = scmp.eq.s32.totalorder %s25, 1
      %p169 = por %p167, %p168
      %p170 = scmp.ne.s32.totalorder %s161, %s162
      %p171 = scmp.eq.s32.totalorder %s25, 0
      %p172 = por %p170, %p171
      %p173 = scmp.ne.s32.totalorder %s161, %s162
      %p174 = scmp.eq.s32.totalorder %s26, 1
      %p175 = por %p173, %p174
      %p177 = scmp.ne.s32.totalorder %s162, %s176
      %p178 = scmp.eq.s32.totalorder %s26, 0
      %p179 = por %p177, %p178
      %s180 = ssub.s32 %s20, %s27
      %p181 = scmp.eq.s32.totalorder %s180, 0
      %s183 = sadd.s32 %s182, 1
      %s184 = scalar_select %p181, %s182, %s183
      %p187 = pneg %p181
      %p188 = scmp.eq.s32.totalorder %s20, 1
      %p189 = por %p187, %p188
      %p190 = scmp.ne.s32.totalorder %s182, %s185
      %p191 = scmp.eq.s32.totalorder %s20, 0
      %p192 = por %p190, %p191
      %p193 = scmp.ne.s32.totalorder %s182, %s185
      %p194 = scmp.eq.s32.totalorder %s25, 1
      %p195 = por %p193, %p194
      %p196 = scmp.ne.s32.totalorder %s185, %s186
      %p197 = scmp.eq.s32.totalorder %s25, 0
      %p198 = por %p196, %p197
      %p199 = scmp.ne.s32.totalorder %s185, %s186
      %p200 = scmp.eq.s32.totalorder %s26, 1
      %p201 = por %p199, %p200
      %p203 = scmp.ne.s32.totalorder %s186, %s202
      %p204 = scmp.eq.s32.totalorder %s26, 0
      %p205 = por %p203, %p204
      %p206 = scmp.le.s32.totalorder 1, %s20
      %p207 = scmp.lt.s32.totalorder %s20, 3
      %p208 = pnand %p206, %p207
      %p209 = pneg %p208
      // Predicated region
      $region9: #{tpu_custom_call.1} parent=5 // pred_check
        _
      $region10: #{tpu_custom_call.1} parent=5 // pred_check_branch
        %211 = sbr.rel (%p208) target = $region12
      $region11: #{tpu_custom_call.1} parent=5 // pred_region
        %s212 = ssub.s32 %s20, 1
        // Predicated region
        $region13: #{tpu_custom_call.1} parent=11 // pred_check
          %p213 = pneg %p67
        $region14: #{tpu_custom_call.1} parent=11 // pred_check_branch
          %215 = sbr.rel (%p213) target = $region16
        $region15: #{tpu_custom_call.1} parent=11 // pred_region
          %s217 = ssub.s32 512, 512
          %218 = vsyncadd [#allocation6], %s217
          %s219 = sshll.u32 [#allocation5], 4
          %s220 = int_to_ptr.vmem [resolvable:$true] %s219
          %225 = dma.hbm_to_vmem [thread:$0]  %s1, 512, %s220, [#allocation6], 128, 128, 8
        $region16: #{tpu_custom_call.1} parent=11 // pred_fallthru
          _
        // Predicated region
        $region17: #{tpu_custom_call.1} parent=11 // pred_check
          %p226 = pneg %p88
        $region18: #{tpu_custom_call.1} parent=11 // pred_check_branch
          %228 = sbr.rel (%p226) target = $region20
        $region19: #{tpu_custom_call.1} parent=11 // pred_region
          _
        $region20: #{tpu_custom_call.1} parent=11 // pred_fallthru
          _
        // Predicated region
        $region21: #{tpu_custom_call.1} parent=11 // pred_check
          %p229 = pneg %p109
        $region22: #{tpu_custom_call.1} parent=11 // pred_check_branch
          %231 = sbr.rel (%p229) target = $region24
        $region23: #{tpu_custom_call.1} parent=11 // pred_region
          %s233 = ssub.s32 512, 512
          %234 = vsyncadd [#allocation6], %s233
          %s235 = sshll.u32 [#allocation7], 4
          %s236 = int_to_ptr.vmem [resolvable:$true] %s235
          %241 = dma.hbm_to_vmem [thread:$0]  %s3, 512, %s236, [#allocation6], 128, 128, 8
        $region24: #{tpu_custom_call.1} parent=11 // pred_fallthru
          _
        // Predicated region
        $region25: #{tpu_custom_call.1} parent=11 // pred_check
          %p242 = pneg %p130
        $region26: #{tpu_custom_call.1} parent=11 // pred_check_branch
          %244 = sbr.rel (%p242) target = $region28
        $region27: #{tpu_custom_call.1} parent=11 // pred_region
          _
        $region28: #{tpu_custom_call.1} parent=11 // pred_fallthru
          _
        // Predicated region
        $region29: #{tpu_custom_call.1} parent=11 // pred_check
          %p245 = pneg %p151
        $region30: #{tpu_custom_call.1} parent=11 // pred_check_branch
          %247 = sbr.rel (%p245) target = $region32
        $region31: #{tpu_custom_call.1} parent=11 // pred_region
          _
        $region32: #{tpu_custom_call.1} parent=11 // pred_fallthru
          _
        // Predicated region
        $region33: #{tpu_custom_call.1} parent=11 // pred_check
          %p248 = pneg %p172
        $region34: #{tpu_custom_call.1} parent=11 // pred_check_branch
          %250 = sbr.rel (%p248) target = $region36
        $region35: #{tpu_custom_call.1} parent=11 // pred_region
          _
        $region36: #{tpu_custom_call.1} parent=11 // pred_fallthru
          _
      $region12: #{tpu_custom_call.1} parent=5 // pred_fallthru
        _
      %p251 = scmp.lt.s32.totalorder %s20, 2
      // Predicated region
      $region37: #{tpu_custom_call.1} parent=5 // pred_check
        %p252 = pneg %p251
      $region38: #{tpu_custom_call.1} parent=5 // pred_check_branch
        %254 = sbr.rel (%p252) target = $region40
      $region39: #{tpu_custom_call.1} parent=5 // pred_region
        // Predicated region
        $region41: #{tpu_custom_call.1} parent=39 // pred_check
          %p255 = pneg %p40
        $region42: #{tpu_custom_call.1} parent=39 // pred_check_branch
          %257 = sbr.rel (%p255) target = $region44
        $region43: #{tpu_custom_call.1} parent=39 // pred_region
          %s258 = sand.u32 %s30, 1
          %s259 = scalar_lea.sflag [#allocation3], %s258
          %s260 = sand.u32 %s30, 1
          %s261 = smul.addr %s260, 8
          %s262 = scalar_lea.vmem [#allocation2], %s261
          %s264 = ssub.s32 128, 128
          %265 = vsyncadd %s259, %s264
          %s266 = smul.addr %s20, 128
          %s267 = scalar_lea.hbm %s0, %s266
          %s269 = sshll.u32 %s262, 4
          %s270 = int_to_ptr.vmem [resolvable:$true] %s269
          %272 = dma.hbm_to_vmem [thread:$0]  %s267, 128, %s270, %s259
        $region44: #{tpu_custom_call.1} parent=39 // pred_fallthru
          _
      $region40: #{tpu_custom_call.1} parent=5 // pred_fallthru
        _
      %p273 = scmp.le.s32.totalorder 1, %s20
      %p274 = scmp.lt.s32.totalorder %s20, 3
      %p275 = pnand %p273, %p274
      %p276 = pneg %p275
      // Predicated region
      $region45: #{tpu_custom_call.1} parent=5 // pred_check
        _
      $region46: #{tpu_custom_call.1} parent=5 // pred_check_branch
        %278 = sbr.rel (%p275) target = $region48
      $region47: #{tpu_custom_call.1} parent=5 // pred_region
        %s279 = ssub.s32 %s20, 1
        %s280 = sand.u32 %s33, 1
        %s281 = scalar_lea.sflag [#allocation3], %s280
        %s282 = sand.u32 %s33, 1
        %s283 = smul.addr %s282, 8
        %s284 = scalar_lea.vmem [#allocation2], %s283
        // Predicated region
        $region49: #{tpu_custom_call.1} parent=47 // pred_check
          %p285 = pneg %p46
        $region50: #{tpu_custom_call.1} parent=47 // pred_check_branch
          %287 = sbr.rel (%p285) target = $region52
        $region51: #{tpu_custom_call.1} parent=47 // pred_region
          %288 = dma.done %s281, 128
        $region52: #{tpu_custom_call.1} parent=47 // pred_fallthru
          _
        // Predicated region
        $region53: #{tpu_custom_call.1} parent=47 // pred_check
          %p289 = pneg %p67
        $region54: #{tpu_custom_call.1} parent=47 // pred_check_branch
          %291 = sbr.rel (%p289) target = $region56
        $region55: #{tpu_custom_call.1} parent=47 // pred_region
          %292 = dma.done [#allocation6], 512
        $region56: #{tpu_custom_call.1} parent=47 // pred_fallthru
          _
        // Predicated region
        $region57: #{tpu_custom_call.1} parent=47 // pred_check
          %p293 = pneg %p109
        $region58: #{tpu_custom_call.1} parent=47 // pred_check_branch
          %295 = sbr.rel (%p293) target = $region60
        $region59: #{tpu_custom_call.1} parent=47 // pred_region
          %296 = dma.done [#allocation6], 512
        $region60: #{tpu_custom_call.1} parent=47 // pred_fallthru
          _
        %s297 = sand.u32 %s33, 1
        %s298 = scalar_lea.sflag [#allocation3], %s297
        %s299 = sand.u32 %s33, 1
        %s300 = smul.addr %s299, 8
        %s301 = scalar_lea.vmem [#allocation2], %s300
        %p302 = pneg %p46
        %p303 = pneg %p43
        %p304 = pneg %p67
        %p305 = pneg %p64
        %p306 = pneg %p88
        %p307 = pneg %p85
        %p308 = pneg %p109
        %p309 = pneg %p106
        %p310 = pneg %p130
        %p311 = pneg %p127
        %p312 = pneg %p151
        %p313 = pneg %p148
        %p314 = pneg %p172
        %p315 = pneg %p169
        %p316 = pneg %p198
        %p317 = pneg %p195
        %s318 = sand.u32 %s185, 1
        %s319 = scalar_lea.sflag [#allocation4], %s318
        %s320 = sand.u32 %s185, 1
        %s321 = smul.addr %s320, 8
        %s322 = scalar_lea.vmem [#allocation8], %s321
        %v323 = vld [vmem:[%s284] sm:$0xff]
        %v324 = vld [vmem:[#allocation5] sm:$0xff]
        %v325 = vld [vmem:[#allocation5 + $0x8] sm:$0xff]
        %v326 = vld [vmem:[#allocation5 + $0x10] sm:$0xff]
        %v327 = vld [vmem:[#allocation5 + $0x18] sm:$0xff]
        %v328 = vld [vmem:[%s2] sm:$0x1]
        %v330 = vlaneseq
        %v331 = vshrl.u32 %v330, 7
        %v332 = vsub.s32 0, %v331
        %v333 = vrot.slane %v328, %v332
        %vm335 = vcmask 261120
        %v337 = vsel %vm335, %v323, 0
        %339 = vmatprep.subr.mxu0 0.0
        %340 = vmatpush1.msra.mxu0 %v324
        %341 = vmatprep.subr.mxu0 0.0
        %342 = vmatpush1.msra.mxu0 %v325
        %343 = vmatprep.subr.mxu0 0.0
        %344 = vmatpush1.msra.mxu0 %v326
        %345 = vmatprep.subr.mxu0 0.0
        %346 = vmatpush1.msra.mxu0 %v327
        %347 = vmatprep.subr.mxu0 0.0
        %348 = vmatpush1.msra.mxu0 0.0
        %349 = vmatprep.subr.mxu0 0.0
        %350 = vmatpush1.msra.mxu0 0.0
        %351 = vmatprep.subr.mxu0 0.0
        %352 = vmatpush1.msra.mxu0 0.0
        %353 = vmatprep.subr.mxu0 0.0
        %354 = vmatpush1.msra.mxu0 0.0
        %355 = vmatprep.subr.mxu0 0.0
        %356 = vmatpush1.msra.mxu0 0.0
        %357 = vmatprep.subr.mxu0 0.0
        %358 = vmatpush1.msra.mxu0 0.0
        %359 = vmatprep.subr.mxu0 0.0
        %360 = vmatpush1.msra.mxu0 0.0
        %361 = vmatprep.subr.mxu0 0.0
        %362 = vmatpush1.msra.mxu0 0.0
        %363 = vmatprep.subr.mxu0 0.0
        %364 = vmatpush1.msra.mxu0 0.0
        %365 = vmatprep.subr.mxu0 0.0
        %366 = vmatpush1.msra.mxu0 0.0
        %367 = vmatprep.subr.mxu0 0.0
        %368 = vmatpush1.msra.mxu0 0.0
        %369 = vmatprep.subr.mxu0 0.0
        %370 = vmatpush1.msra.mxu0 0.0
        %371 = vmatprep.subr.mxu0 0.0
        %372 = vmatpush1.msra.mxu0 0.0
        %373 = vmatprep.subr.mxu0 0.0
        %374 = vmatpush1.msra.mxu0 0.0
        %375 = vmatprep.subr.mxu0 0.0
        %376 = vmatpush1.msra.mxu0 0.0
        %377 = vmatprep.subr.mxu0 0.0
        %378 = vmatpush1.msra.mxu0 0.0
        %379 = vmatprep.subr.mxu0 0.0
        %380 = vmatpush1.msra.mxu0 0.0
        %381 = vmatprep.subr.mxu0 0.0
        %382 = vmatpush1.msra.mxu0 0.0
        %383 = vmatprep.subr.mxu0 0.0
        %384 = vmatpush1.msra.mxu0 0.0
        %385 = vmatprep.subr.mxu0 0.0
        %386 = vmatpush1.msra.mxu0 0.0
        %387 = vmatprep.subr.mxu0 0.0
        %388 = vmatpush1.msra.mxu0 0.0
        %389 = vmatprep.subr.mxu0 0.0
        %390 = vmatpush1.msra.mxu0 0.0
        %391 = vmatprep.subr.mxu0 0.0
        %392 = vmatpush1.msra.mxu0 0.0
        %393 = vmatprep.subr.mxu0 0.0
        %394 = vmatpush1.msra.mxu0 0.0
        %395 = vmatprep.subr.mxu0 0.0
        %396 = vmatpush1.msra.mxu0 0.0
        %397 = vmatprep.subr.mxu0 0.0
        %398 = vmatpush1.msra.mxu0 0.0
        %399 = vmatprep.subr.mxu0 0.0
        %400 = vmatpush1.msra.mxu0 0.0
        %401 = vmatprep.subr.mxu0 0.0
        %402 = vmatpush1.msra.mxu0 0.0
        %403 = vmatprep.mubr.f32.mxu0 0.0
        %404 = vmatmul.mubr.f32.gmra.mrb[0].mxu0 %v337
        %v405 = vpop.f32.mrb[0].mxu0
        %v406 = vadd.f32 %v333, %v405
        %v407 = vpop.f32.mrb[0].mxu0
        %408 = vdwg.mxu0
        %v409 = vmax.f32 %v406, 0.0
        %v410 = vld [vmem:[#allocation7] sm:$0xff]
        %v411 = vld [vmem:[#allocation7 + $0x8] sm:$0xff]
        %v412 = vld [vmem:[#allocation7 + $0x10] sm:$0xff]
        %v413 = vld [vmem:[#allocation7 + $0x18] sm:$0xff]
        %v415 = vsel %vm335, %v409, 0
        %417 = vmatprep.subr.mxu0 0.0
        %418 = vmatpush1.msra.mxu0 %v410
        %419 = vmatprep.subr.mxu0 0.0
        %420 = vmatpush1.msra.mxu0 %v411
        %421 = vmatprep.subr.mxu0 0.0
        %422 = vmatpush1.msra.mxu0 %v412
        %423 = vmatprep.subr.mxu0 0.0
        %424 = vmatpush1.msra.mxu0 %v413
        %425 = vmatprep.subr.mxu0 0.0
        %426 = vmatpush1.msra.mxu0 0.0
        %427 = vmatprep.subr.mxu0 0.0
        %428 = vmatpush1.msra.mxu0 0.0
        %429 = vmatprep.subr.mxu0 0.0
        %430 = vmatpush1.msra.mxu0 0.0
        %431 = vmatprep.subr.mxu0 0.0
        %432 = vmatpush1.msra.mxu0 0.0
        %433 = vmatprep.subr.mxu0 0.0
        %434 = vmatpush1.msra.mxu0 0.0
        %435 = vmatprep.subr.mxu0 0.0
        %436 = vmatpush1.msra.mxu0 0.0
        %437 = vmatprep.subr.mxu0 0.0
        %438 = vmatpush1.msra.mxu0 0.0
        %439 = vmatprep.subr.mxu0 0.0
        %440 = vmatpush1.msra.mxu0 0.0
        %441 = vmatprep.subr.mxu0 0.0
        %442 = vmatpush1.msra.mxu0 0.0
        %443 = vmatprep.subr.mxu0 0.0
        %444 = vmatpush1.msra.mxu0 0.0
        %445 = vmatprep.subr.mxu0 0.0
        %446 = vmatpush1.msra.mxu0 0.0
        %447 = vmatprep.subr.mxu0 0.0
        %448 = vmatpush1.msra.mxu0 0.0
        %449 = vmatprep.subr.mxu0 0.0
        %450 = vmatpush1.msra.mxu0 0.0
        %451 = vmatprep.subr.mxu0 0.0
        %452 = vmatpush1.msra.mxu0 0.0
        %453 = vmatprep.subr.mxu0 0.0
        %454 = vmatpush1.msra.mxu0 0.0
        %455 = vmatprep.subr.mxu0 0.0
        %456 = vmatpush1.msra.mxu0 0.0
        %457 = vmatprep.subr.mxu0 0.0
        %458 = vmatpush1.msra.mxu0 0.0
        %459 = vmatprep.subr.mxu0 0.0
        %460 = vmatpush1.msra.mxu0 0.0
        %461 = vmatprep.subr.mxu0 0.0
        %462 = vmatpush1.msra.mxu0 0.0
        %463 = vmatprep.subr.mxu0 0.0
        %464 = vmatpush1.msra.mxu0 0.0
        %465 = vmatprep.subr.mxu0 0.0
        %466 = vmatpush1.msra.mxu0 0.0
        %467 = vmatprep.subr.mxu0 0.0
        %468 = vmatpush1.msra.mxu0 0.0
        %469 = vmatprep.subr.mxu0 0.0
        %470 = vmatpush1.msra.mxu0 0.0
        %471 = vmatprep.subr.mxu0 0.0
        %472 = vmatpush1.msra.mxu0 0.0
        %473 = vmatprep.subr.mxu0 0.0
        %474 = vmatpush1.msra.mxu0 0.0
        %475 = vmatprep.subr.mxu0 0.0
        %476 = vmatpush1.msra.mxu0 0.0
        %477 = vmatprep.subr.mxu0 0.0
        %478 = vmatpush1.msra.mxu0 0.0
        %479 = vmatprep.subr.mxu0 0.0
        %480 = vmatpush1.msra.mxu0 0.0
        %481 = vmatprep.mubr.f32.mxu0 0.0
        %482 = vmatmul.mubr.f32.gmra.mrb[0].mxu0 %v415
        %v483 = vpop.f32.mrb[0].mxu0
        %v484 = vadd.f32 0.0, %v483
        %v485 = vpop.f32.mrb[0].mxu0
        %486 = vdwg.mxu0
        %v487 = vadd.f32 %v323, %v484
        %v488 = vld [vmem:[%s4] sm:$0x1]
        %v490 = vlaneseq
        %v491 = vshrl.u32 %v490, 7
        %v492 = vsub.s32 0, %v491
        %v493 = vrot.slane %v488, %v492
        %v495 = vadd.f32 %v487, %v493
        %v496 = vld [vmem:[%s5] sm:$0x1]
        %v497 = vld [vmem:[%s6] sm:$0x1]
        %v498 = vsel %vm335, %v495, 0.0
        %499 = vadd.xlane.f32.xlu0 %v498
        %v500 = vpop.xlane.xlu0 %499
        %v501 = vrcp.pop 32.0
        %v502 = vmul.f32 %v500, %v501
        %v503 = vmul.f32 %v495, %v495
        %v504 = vsel %vm335, %v503, 0.0
        %505 = vadd.xlane.f32.xlu0 %v504
        %v506 = vpop.xlane.xlu0 %505
        %v507 = vmul.f32 %v506, %v501
        %v508 = vmul.f32 %v502, %v502
        %v509 = vsub.f32 %v507, %v508
        %v510 = vsub.f32 %v495, %v502
        %v511 = vadd.f32 %v509, 1e-05
        %v512 = vrsqrt.pop %v511
        %v513 = vmul.f32 %v510, %v512
        %v515 = vlaneseq
        %v516 = vshrl.u32 %v515, 7
        %v517 = vsub.s32 0, %v516
        %v518 = vrot.slane %v496, %v517
        %v520 = vmul.f32 %v513, %v518
        %v522 = vlaneseq
        %v523 = vshrl.u32 %v522, 7
        %v524 = vsub.s32 0, %v523
        %v525 = vrot.slane %v497, %v524
        %v527 = vadd.f32 %v520, %v525
        %528 = vst.msk [vmem:[%s322] sm:$0xff] %vm335, %v527
        %s529 = sand.u32 %s185, 1
        %s530 = scalar_lea.sflag [#allocation4], %s529
        %s531 = sand.u32 %s185, 1
        %s532 = smul.addr %s531, 8
        %s533 = scalar_lea.vmem [#allocation8], %s532
        // Predicated region
        $region61: #{tpu_custom_call.1} parent=47 // pred_check
          %p534 = pneg %p195
        $region62: #{tpu_custom_call.1} parent=47 // pred_check_branch
          %536 = sbr.rel (%p534) target = $region64
        $region63: #{tpu_custom_call.1} parent=47 // pred_region
          %s538 = ssub.s32 128, 128
          %539 = vsyncadd %s530, %s538
          %s540 = smul.addr %s25, 128
          %s541 = scalar_lea.hbm %s7, %s540
          %s543 = sshll.u32 %s533, 4
          %s544 = int_to_ptr.vmem [resolvable:$true] %s543
          %546 = dma.vmem_to_hbm [thread:$0]  %s544, 128, %s541, %s530
        $region64: #{tpu_custom_call.1} parent=47 // pred_fallthru
          _
      $region48: #{tpu_custom_call.1} parent=5 // pred_fallthru
        _
      %p547 = scmp.le.s32.totalorder 2, %s20
      // Predicated region
      $region65: #{tpu_custom_call.1} parent=5 // pred_check
        %p548 = pneg %p547
      $region66: #{tpu_custom_call.1} parent=5 // pred_check_branch
        %550 = sbr.rel (%p548) target = $region68
      $region67: #{tpu_custom_call.1} parent=5 // pred_region
        %s551 = ssub.s32 %s20, 2
        // Predicated region
        $region69: #{tpu_custom_call.1} parent=67 // pred_check
          %p552 = pneg %p201
        $region70: #{tpu_custom_call.1} parent=67 // pred_check_branch
          %554 = sbr.rel (%p552) target = $region72
        $region71: #{tpu_custom_call.1} parent=67 // pred_region
          %s555 = sand.u32 %s186, 1
          %s556 = scalar_lea.sflag [#allocation4], %s555
          %s557 = sand.u32 %s186, 1
          %s558 = smul.addr %s557, 8
          %s559 = scalar_lea.vmem [#allocation8], %s558
          %560 = dma.done %s556, 128
        $region72: #{tpu_custom_call.1} parent=67 // pred_fallthru
          _
      $region68: #{tpu_custom_call.1} parent=5 // pred_fallthru
        _
    $region6: #{tpu_custom_call.1} parent=1 // loop_footer
      %s24 = sadd.s32 1, %s20
    $region7: #{tpu_custom_call.1} parent=1 // loop_footer_branch
      %19 = sbr.rel target = $region3
    $region8: #{tpu_custom_call.1} parent=1 // loop_exit
      _
    %561 = vsyncpa [#allocation3], 1
    %s562 = scalar_lea.sflag [#allocation3], 1
    %563 = vsyncpa %s562, 1
    %564 = vsyncpa [#allocation6], 1
    %565 = vsyncpa [#allocation4], 1
    %s566 = scalar_lea.sflag [#allocation4], 1
    %567 = vsyncpa %s566, 1

</llo_original>
